<compile_context>
chip_gen: v5e
topology: v5e:2x2
jax: 0.10.0
libtpu: 0.0.40
codegen_flags: <defaults>
</compile_context>

<pallas_src>
import jax
import jax.numpy as jnp
from jax.experimental import pallas as pl
from jax.experimental.pallas import tpu as pltpu

_MIB = 1024 * 1024
_VMEM_LIMIT_BYTES = 32 * _MIB     # safe on v5e/v6e (128 MiB phys) and v7x (64 MiB phys)
_RESIDENT_BUDGET_BYTES = 28 * _MIB  # headroom under the scoped limit


# --------------------------------------------------------------------------
# Kernels
# --------------------------------------------------------------------------
def _head_resident_kernel(x_ref, w1_ref, b1_ref, w2_ref, b2_ref, o_ref):
    # x_ref:  [tb, H]  CLS activations (bf16)
    # w1_ref: [H, H]   dense weight, [in, out] layout (bf16), VMEM-resident
    # b1_ref: [1, H]   dense bias (f32)
    # w2_ref: [H, Lp]  out_proj weight, [in, out] layout (bf16), VMEM-resident
    # b2_ref: [1, Lp]  out_proj bias, lane-padded (f32)
    # o_ref:  [tb, Lp] padded logits (f32)
    h = jnp.dot(x_ref[...], w1_ref[...], preferred_element_type=jnp.float32)
    h = jnp.tanh(h + b1_ref[...])
    o = jnp.dot(h.astype(w2_ref.dtype), w2_ref[...],
                preferred_element_type=jnp.float32)
    o_ref[...] = (o + b2_ref[...]).astype(o_ref.dtype)


def _head_tiled_kernel(x_ref, w1_ref, b1_ref, w2_ref, b2_ref, o_ref, acc_ref):
    # Fallback: weights streamed in tn-wide tiles over the intermediate-hidden
    # dim; x and the output/accumulator stay resident -> W1/W2 HBM-read once.
    # x_ref:  [B, H]    (resident)    w1_ref: [H, tn]   b1_ref: [1, tn]
    # w2_ref: [tn, Lp]  b2_ref: [1, Lp]
    # o_ref:  [B, Lp]   (resident)    acc_ref: [B, Lp] f32 scratch
    j = pl.program_id(0)

    @pl.when(j == 0)
    def _init():
        acc_ref[...] = jnp.zeros_like(acc_ref)

    h = jnp.dot(x_ref[...], w1_ref[...], preferred_element_type=jnp.float32)
    h = jnp.tanh(h + b1_ref[...])
    acc_ref[...] += jnp.dot(h.astype(w2_ref.dtype), w2_ref[...],
                            preferred_element_type=jnp.float32)

    @pl.when(j == pl.num_programs(0) - 1)
    def _finalize():
        o_ref[...] = (acc_ref[...] + b2_ref[...]).astype(o_ref.dtype)


# --------------------------------------------------------------------------
# One-time parameter preparation (outside the hot path)
# --------------------------------------------------------------------------
def prepare_params(dense_w, dense_b, out_w, out_b,
                   weight_dtype=jnp.bfloat16, lane=128):
    """Transpose PyTorch [out, in] weights ONCE to [in, out], cast the big
    weight streams to bf16, pad the label dim to exactly one 128-lane tile.
    Biases stay f32 (tiny, added post-accumulation)."""
    H = dense_w.shape[1]
    L = out_w.shape[0]
    Lp = max(lane, -(-L // lane) * lane)
    w1 = jnp.asarray(dense_w).T.astype(weight_dtype)                    # [H, H]
    b1 = jnp.asarray(dense_b).reshape(1, H).astype(jnp.float32)         # [1, H]
    w2 = jnp.zeros((H, Lp), weight_dtype).at[:, :L].set(
        jnp.asarray(out_w).T.astype(weight_dtype))                      # [H, Lp]
    b2 = jnp.zeros((1, Lp), jnp.float32).at[0, :L].set(
        jnp.asarray(out_b).astype(jnp.float32))                         # [1, Lp]
    return w1, b1, w2, b2, L


# --------------------------------------------------------------------------
# VMEM sizing helpers (double-buffered block estimates)
# --------------------------------------------------------------------------
def _resident_vmem_bytes(tb, H, Lp, wsize):
    per_buf = (tb * H * wsize          # x block
               + H * H * wsize         # w1 (resident)
               + H * 4                 # b1
               + H * Lp * wsize        # w2 (resident)
               + Lp * 4                # b2
               + tb * Lp * 4)          # output block
    return 2 * per_buf


def _tiled_vmem_bytes(B, H, tn, Lp, wsize):
    per_buf = (B * H * wsize + H * tn * wsize + tn * 4
               + tn * Lp * wsize + Lp * 4 + B * Lp * 4)
    return 2 * per_buf + B * Lp * 4    # + f32 accumulator scratch


# --------------------------------------------------------------------------
# Wrapper
# --------------------------------------------------------------------------
def roberta_classification_head(features, w1, b1, w2, b2, num_labels,
                                *, force_tiled=False):
    """features: [B, S, H]; (w1, b1, w2, b2) from prepare_params().
    Returns [B, num_labels] logits (f32)."""
    B, S, H = features.shape
    Lp = w2.shape[1]
    wsize = jnp.dtype(w1.dtype).itemsize

    # CLS token, pre-cast to the weight-stream dtype (halves x DMA bytes and
    # removes the per-iteration in-kernel cast).
    x = features[:, 0, :].astype(w1.dtype)

    compiler_kw = dict(vmem_limit_bytes=_VMEM_LIMIT_BYTES)
    weight_bytes = w1.size * wsize + w2.size * wsize + b1.size * 4 + b2.size * 4
    io_bytes = B * H * wsize + B * Lp * 4
    cost = pl.CostEstimate(flops=2 * B * H * H + 2 * B * H * Lp,
                           transcendentals=B * H,
                           bytes_accessed=weight_bytes + io_bytes)

    # ---- routing: weight-resident (preferred) vs streamed fallback ----
    tb = None
    if not force_tiled:
        for cand in (B, 1024, 512, 256, 128, 8):
            if (cand <= B and B % cand == 0
                    and _resident_vmem_bytes(cand, H, Lp, wsize)
                    <= _RESIDENT_BUDGET_BYTES):
                tb = cand
                break

    if tb is not None:
        # --- primary path: W1/W2 VMEM-resident, no reduction axis ---
        out_padded = pl.pallas_call(
            _head_resident_kernel,
            out_shape=jax.ShapeDtypeStruct((B, Lp), jnp.float32),
            grid_spec=pltpu.PrefetchScalarGridSpec(
                num_scalar_prefetch=0,
                grid=(B // tb,),
                in_specs=[
                    pl.BlockSpec((tb, H), lambda i: (i, 0)),   # x batch tile
                    pl.BlockSpec((H, H), lambda i: (0, 0)),    # w1 (fetched once)
                    pl.BlockSpec((1, H), lambda i: (0, 0)),    # b1
                    pl.BlockSpec((H, Lp), lambda i: (0, 0)),   # w2 (fetched once)
                    pl.BlockSpec((1, Lp), lambda i: (0, 0)),   # b2
                ],
                out_specs=pl.BlockSpec((tb, Lp), lambda i: (i, 0)),
            ),
            compiler_params=pltpu.CompilerParams(
                dimension_semantics=("parallel",), **compiler_kw),
            cost_estimate=cost,
        )(x, w1, b1, w2, b2)
        return out_padded[:, :num_labels]

    # --- fallback path: stream weight tiles once; x / output resident ---
    assert H % 128 == 0, "tiled fallback requires hidden_size % 128 == 0"
    tn = 128
    for cand in (2048, 1024, 512, 256, 128):
        if H % cand == 0 and _tiled_vmem_bytes(B, H, cand, Lp, wsize) \
                <= _RESIDENT_BUDGET_BYTES:
            tn = cand
            break

    out_padded = pl.pallas_call(
        _head_tiled_kernel,
        out_shape=jax.ShapeDtypeStruct((B, Lp), jnp.float32),
        grid_spec=pltpu.PrefetchScalarGridSpec(
            num_scalar_prefetch=0,
            grid=(H // tn,),
            in_specs=[
                pl.BlockSpec((B, H), lambda j: (0, 0)),     # x (resident)
                pl.BlockSpec((H, tn), lambda j: (0, j)),    # w1 col-tile
                pl.BlockSpec((1, tn), lambda j: (0, j)),    # b1 tile
                pl.BlockSpec((tn, Lp), lambda j: (j, 0)),   # w2 row-tile
                pl.BlockSpec((1, Lp), lambda j: (0, 0)),    # b2
            ],
            out_specs=pl.BlockSpec((B, Lp), lambda j: (0, 0)),
            scratch_shapes=[pltpu.VMEM((B, Lp), jnp.float32)],
        ),
        compiler_params=pltpu.CompilerParams(
            dimension_semantics=("arbitrary",), **compiler_kw),
        cost_estimate=cost,
    )(x, w1, b1, w2, b2)
    return out_padded[:, :num_labels]


# --------------------------------------------------------------------------
# Pure-JAX reference
# --------------------------------------------------------------------------
def reference(features, dense_w, dense_b, out_w, out_b):
    x = features[:, 0, :]
    x = jnp.tanh(x @ dense_w.T + dense_b)
    return x @ out_w.T + out_b


if __name__ == "__main__":
    # ---- small shapes consistent with the module ----
    B, S, H, L = 2, 8, 32, 3   # batch, seq, hidden_size, num_labels

    key = jax.random.PRNGKey(0)
    k0, k1, k2, k3, k4 = jax.random.split(key, 5)

    features = jax.random.normal(k0, (B, S, H), dtype=jnp.float32)
    dense_w = jax.random.normal(k1, (H, H), dtype=jnp.float32) * 0.05
    dense_b = jax.random.normal(k2, (H,), dtype=jnp.float32) * 0.05
    out_w = jax.random.normal(k3, (L, H), dtype=jnp.float32) * 0.05
    out_b = jax.random.normal(k4, (L,), dtype=jnp.float32) * 0.05

    w1, b1, w2, b2, num_labels = prepare_params(dense_w, dense_b, out_w, out_b)

    # Primary (weight-resident) path.
    out = roberta_classification_head(features, w1, b1, w2, b2, num_labels)
    out = jax.block_until_ready(out)
    ref = reference(features, dense_w, dense_b, out_w, out_b)
    assert out.shape == (B, L), out.shape
    max_err = jnp.max(jnp.abs(out - ref))
    assert jnp.allclose(out, ref, atol=1e-2, rtol=1e-2), (
        f"resident path mismatch vs reference: max abs err {max_err}")

    # Exercise the streamed fallback path (used when resident weights would
    # exceed the scoped-VMEM budget at very large hidden sizes).
    B2, S2, H2, L2 = 4, 8, 256, 3
    kk = jax.random.split(jax.random.PRNGKey(1), 5)
    features2 = jax.random.normal(kk[0], (B2, S2, H2), dtype=jnp.float32)
    dw = jax.random.normal(kk[1], (H2, H2), dtype=jnp.float32) * 0.02
    db = jax.random.normal(kk[2], (H2,), dtype=jnp.float32) * 0.02
    ow = jax.random.normal(kk[3], (L2, H2), dtype=jnp.float32) * 0.02
    ob = jax.random.normal(kk[4], (L2,), dtype=jnp.float32) * 0.02
    p1, p2, p3, p4, nl2 = prepare_params(dw, db, ow, ob)
    out2 = roberta_classification_head(features2, p1, p2, p3, p4, nl2,
                                       force_tiled=True)
    out2 = jax.block_until_ready(out2)
    ref2 = reference(features2, dw, db, ow, ob)
    max_err2 = jnp.max(jnp.abs(out2 - ref2))
    assert out2.shape == (B2, L2), out2.shape
    assert jnp.allclose(out2, ref2, atol=2e-2, rtol=2e-2), (
        f"tiled path mismatch vs reference: max abs err {max_err2}")

    print("KERNEL_OK")
</pallas_src>

<mosaic_0001>
module attributes {stable_mosaic.version = 11 : i64} {
  func.func @_head_resident_kernel(%arg0: i32, %arg1: memref<2x32xbf16, #tpu.memory_space<vmem>>, %arg2: memref<32x32xbf16, #tpu.memory_space<vmem>>, %arg3: memref<1x32xf32, #tpu.memory_space<vmem>>, %arg4: memref<32x128xbf16, #tpu.memory_space<vmem>>, %arg5: memref<1x128xf32, #tpu.memory_space<vmem>>, %arg6: memref<2x128xf32, #tpu.memory_space<vmem>>) attributes {dimension_semantics = [#tpu.dimension_semantics<parallel>], iteration_bounds = array<i64: 1>, scalar_prefetch = 0 : i64, scratch_operands = 0 : i64, tpu.core_type = #tpu.core_type<tc>, window_params = [{transform_indices = @transform_0, window_bounds = array<i64: 2, 32>}, {pipeline_mode = #tpu.pipeline_mode<synchronous>, transform_indices = @transform_1, window_bounds = array<i64: 32, 32>}, {pipeline_mode = #tpu.pipeline_mode<synchronous>, transform_indices = @transform_2, window_bounds = array<i64: 1, 32>}, {pipeline_mode = #tpu.pipeline_mode<synchronous>, transform_indices = @transform_3, window_bounds = array<i64: 32, 128>}, {pipeline_mode = #tpu.pipeline_mode<synchronous>, transform_indices = @transform_4, window_bounds = array<i64: 1, 128>}, {transform_indices = @transform_5, window_bounds = array<i64: 2, 128>}]} {
    %c0 = arith.constant 0 : index
    %c0_0 = arith.constant 0 : index
    %0 = vector.load %arg1[%c0, %c0_0] : memref<2x32xbf16, #tpu.memory_space<vmem>>, vector<2x32xbf16>
    %c0_1 = arith.constant 0 : index
    %c0_2 = arith.constant 0 : index
    %1 = vector.load %arg2[%c0_1, %c0_2] : memref<32x32xbf16, #tpu.memory_space<vmem>>, vector<32x32xbf16>
    %cst = arith.constant dense<0.000000e+00> : vector<2x32xf32>
    %2 = tpu.matmul %0, %1, %cst {dimension_numbers = #tpu.dot_dimension_numbers<[1], [0], [0], [1], [0, 0, 1, 1], [], []>} : vector<2x32xbf16>, vector<32x32xbf16>, vector<2x32xf32> -> vector<2x32xf32>
    %c0_3 = arith.constant 0 : index
    %c0_4 = arith.constant 0 : index
    %3 = vector.load %arg3[%c0_3, %c0_4] : memref<1x32xf32, #tpu.memory_space<vmem>>, vector<1x32xf32>
    %4 = vector.broadcast %3 : vector<1x32xf32> to vector<2x32xf32>
    %5 = arith.addf %2, %4 : vector<2x32xf32>
    %6 = math.tanh %5 : vector<2x32xf32>
    %7 = arith.truncf %6 : vector<2x32xf32> to vector<2x32xbf16>
    %c0_5 = arith.constant 0 : index
    %c0_6 = arith.constant 0 : index
    %8 = vector.load %arg4[%c0_5, %c0_6] : memref<32x128xbf16, #tpu.memory_space<vmem>>, vector<32x128xbf16>
    %cst_7 = arith.constant dense<0.000000e+00> : vector<2x128xf32>
    %9 = tpu.matmul %7, %8, %cst_7 {dimension_numbers = #tpu.dot_dimension_numbers<[1], [0], [0], [1], [0, 0, 1, 1], [], []>} : vector<2x32xbf16>, vector<32x128xbf16>, vector<2x128xf32> -> vector<2x128xf32>
    %c0_8 = arith.constant 0 : index
    %c0_9 = arith.constant 0 : index
    %10 = vector.load %arg5[%c0_8, %c0_9] : memref<1x128xf32, #tpu.memory_space<vmem>>, vector<1x128xf32>
    %11 = vector.broadcast %10 : vector<1x128xf32> to vector<2x128xf32>
    %12 = arith.addf %9, %11 : vector<2x128xf32>
    %c0_10 = arith.constant 0 : index
    %c0_11 = arith.constant 0 : index
    %13 = vector.load %arg6[%c0_10, %c0_11] : memref<2x128xf32, #tpu.memory_space<vmem>>, vector<2x128xf32>
    tpu.vector_store %arg6[%c0_10, %c0_11], %12 {strides = array<i32>} : memref<2x128xf32, #tpu.memory_space<vmem>>, vector<2x128xf32>,
    return
  }
  func.func @transform_0(%arg0: i32) -> (i32, i32) {
    %c0_i32 = arith.constant 0 : i32
    %c0_i32_0 = arith.constant 0 : i32
    return %arg0, %c0_i32 : i32, i32
  }
  func.func @transform_1(%arg0: i32) -> (i32, i32) {
    %c0_i32 = arith.constant 0 : i32
    %c0_i32_0 = arith.constant 0 : i32
    %c0_i32_1 = arith.constant 0 : i32
    return %c0_i32, %c0_i32_0 : i32, i32
  }
  func.func @transform_2(%arg0: i32) -> (i32, i32) {
    %c0_i32 = arith.constant 0 : i32
    %c0_i32_0 = arith.constant 0 : i32
    %c0_i32_1 = arith.constant 0 : i32
    return %c0_i32, %c0_i32_0 : i32, i32
  }
  func.func @transform_3(%arg0: i32) -> (i32, i32) {
    %c0_i32 = arith.constant 0 : i32
    %c0_i32_0 = arith.constant 0 : i32
    %c0_i32_1 = arith.constant 0 : i32
    return %c0_i32, %c0_i32_0 : i32, i32
  }
  func.func @transform_4(%arg0: i32) -> (i32, i32) {
    %c0_i32 = arith.constant 0 : i32
    %c0_i32_0 = arith.constant 0 : i32
    %c0_i32_1 = arith.constant 0 : i32
    return %c0_i32, %c0_i32_0 : i32, i32
  }
  func.func @transform_5(%arg0: i32) -> (i32, i32) {
    %c0_i32 = arith.constant 0 : i32
    %c0_i32_0 = arith.constant 0 : i32
    return %arg0, %c0_i32 : i32, i32
  }
}

</mosaic_0001>

<llo_original>
// kernel: tpu_custom_call.1
$region0: #{tpu_custom_call.1}
  #allocation0 [shape = 'u32[]', space=smem, size = 0x4, offset = 0x4, fixed_abs, tag = 'smem constant byte address 0x4 - core index']
  #allocation1 [shape = 'u32[72,128]{1,0:T(1,128)}', space=vmem, size = 0x9000, scoped, tag = 'internal scratch']
  %s0 = inlined_call_operand.hbm [shape: bf16[2,32], index: 0, kind: input, shape index: {}]
  %s1 = inlined_call_operand.hbm [shape: bf16[32,32], index: 1, kind: input, shape index: {}]
  %s2 = inlined_call_operand.vmem [shape: f32[1,32], index: 2, kind: input, shape index: {}]
  %s3 = inlined_call_operand.hbm [shape: bf16[32,128], index: 3, kind: input, shape index: {}]
  %s4 = inlined_call_operand.vmem [shape: f32[1,128], index: 4, kind: input, shape index: {}]
  %s5 = inlined_call_operand.hbm [shape: f32[2,128], index: 5, kind: output, shape index: {}]
  %s6 = sld [smem:[#allocation0]]
  $region42: #{tpu_custom_call.1} parent=0
    _
  %s8 = ssub.s32 1, %s6
  %s9 = scalar_select 0, %s8, %s6
  $region1: #{tpu_custom_call.1} parent=0
    #allocation2 [shape = 'u8[512]{0}', space=vmem, size = 0x400, scoped, tag = 'input window, operand 0, single buffered']
    #allocation3 [shape = 's32[1]{0}', space=sflag, size = 0x4, scoped, tag = 'scoped memory for tpu_custom_call.1']
    #allocation4 [shape = 's32[1]{0}', space=sflag, size = 0x4, scoped, tag = 'scoped memory for tpu_custom_call.1']
    #allocation5 [shape = 'u8[8192]{0}', space=vmem, size = 0x2000, scoped, tag = 'input window, operand 1, single buffered']
    #allocation6 [shape = 's32[1]{0}', space=sflag, size = 0x4, scoped, tag = 'scoped memory for tpu_custom_call.1']
    #allocation7 [shape = 'u8[8192]{0}', space=vmem, size = 0x2000, scoped, tag = 'input window, operand 3, single buffered']
    #allocation8 [shape = 'u8[1024]{0}', space=vmem, size = 0x400, scoped, tag = 'output window, operand 0, single buffered']
    %10 = vsyncpa [#allocation3], 0
    %11 = vsyncpa [#allocation6], 0
    %12 = vsyncpa [#allocation4], 0
    // Predicated region
    $region2: #{tpu_custom_call.1} parent=1 // pred_check
      _
    $region3: #{tpu_custom_call.1} parent=1 // pred_check_branch
      %14 = sbr.rel (0) target = $region5
    $region4: #{tpu_custom_call.1} parent=1 // pred_region
      %16 = vsyncadd [#allocation3], 0
      %s18 = sshll.u32 %s0, 4
      %s19 = int_to_ptr.hbm [resolvable:$true] %s18
      %s20 = sshll.u32 [#allocation2], 4
      %s21 = int_to_ptr.vmem [resolvable:$true] %s20
      %23 = dma.hbm_to_vmem [thread:$0]  %s19, 16, %s21, [#allocation3]
    $region5: #{tpu_custom_call.1} parent=1 // pred_fallthru
      _
    // Predicated region
    $region6: #{tpu_custom_call.1} parent=1 // pred_check
      _
    $region7: #{tpu_custom_call.1} parent=1 // pred_check_branch
      %25 = sbr.rel (0) target = $region9
    $region8: #{tpu_custom_call.1} parent=1 // pred_region
      %27 = vsyncadd [#allocation6], 0
      %s28 = sshll.u32 %s1, 4
      %s29 = int_to_ptr.hbm [resolvable:$true] %s28
      %s30 = sshll.u32 [#allocation5], 4
      %s31 = int_to_ptr.vmem [resolvable:$true] %s30
      %36 = dma.hbm_to_vmem [thread:$0]  %s29, 256, %s31, [#allocation6], 64, 64, 4
    $region9: #{tpu_custom_call.1} parent=1 // pred_fallthru
      _
    // Predicated region
    $region10: #{tpu_custom_call.1} parent=1 // pred_check
      _
    $region11: #{tpu_custom_call.1} parent=1 // pred_check_branch
      %38 = sbr.rel (0) target = $region13
    $region12: #{tpu_custom_call.1} parent=1 // pred_region
      _
    $region13: #{tpu_custom_call.1} parent=1 // pred_fallthru
      _
    // Predicated region
    $region14: #{tpu_custom_call.1} parent=1 // pred_check
      _
    $region15: #{tpu_custom_call.1} parent=1 // pred_check_branch
      %40 = sbr.rel (0) target = $region17
    $region16: #{tpu_custom_call.1} parent=1 // pred_region
      %42 = vsyncadd [#allocation6], 0
      %s43 = sshll.u32 %s3, 4
      %s44 = int_to_ptr.hbm [resolvable:$true] %s43
      %s45 = sshll.u32 [#allocation7], 4
      %s46 = int_to_ptr.vmem [resolvable:$true] %s45
      %51 = dma.hbm_to_vmem [thread:$0]  %s44, 256, %s46, [#allocation6], 64, 64, 4
    $region17: #{tpu_custom_call.1} parent=1 // pred_fallthru
      _
    // Predicated region
    $region18: #{tpu_custom_call.1} parent=1 // pred_check
      _
    $region19: #{tpu_custom_call.1} parent=1 // pred_check_branch
      %53 = sbr.rel (0) target = $region21
    $region20: #{tpu_custom_call.1} parent=1 // pred_region
      _
    $region21: #{tpu_custom_call.1} parent=1 // pred_fallthru
      _
    // Predicated region
    $region22: #{tpu_custom_call.1} parent=1 // pred_check
      _
    $region23: #{tpu_custom_call.1} parent=1 // pred_check_branch
      %55 = sbr.rel (0) target = $region25
    $region24: #{tpu_custom_call.1} parent=1 // pred_region
      %57 = dma.done [#allocation3], 16
    $region25: #{tpu_custom_call.1} parent=1 // pred_fallthru
      _
    // Predicated region
    $region26: #{tpu_custom_call.1} parent=1 // pred_check
      _
    $region27: #{tpu_custom_call.1} parent=1 // pred_check_branch
      %59 = sbr.rel (0) target = $region29
    $region28: #{tpu_custom_call.1} parent=1 // pred_region
      %61 = dma.done [#allocation6], 256
    $region29: #{tpu_custom_call.1} parent=1 // pred_fallthru
      _
    // Predicated region
    $region30: #{tpu_custom_call.1} parent=1 // pred_check
      _
    $region31: #{tpu_custom_call.1} parent=1 // pred_check_branch
      %63 = sbr.rel (0) target = $region33
    $region32: #{tpu_custom_call.1} parent=1 // pred_region
      %65 = dma.done [#allocation6], 256
    $region33: #{tpu_custom_call.1} parent=1 // pred_fallthru
      _
    %v67 = vld [vmem:[#allocation2] sm:$0x1]
    %v68 = vld [vmem:[#allocation5] sm:$0xf]
    %v69 = vld [vmem:[#allocation5 + $0x4] sm:$0xf]
    %v70 = vld [vmem:[#allocation5 + $0x8] sm:$0xf]
    %v71 = vld [vmem:[#allocation5 + $0xc] sm:$0xf]
    %v72 = vld [vmem:[%s2] sm:$0x1]
    %v74 = vperm.slane %v72, 0
    %v80 = vunpack.c.l.b16 %v68
    %v81 = vunpack.c.l.b16 %v69
    %v82 = vunpack.c.l.b16 %v70
    %v83 = vunpack.c.l.b16 %v71
    %v84 = vpack.c.b16 %v81, %v80
    %v85 = vpack.c.b16 %v83, %v82
    %vm88 = vcmask 261120
    %v90 = vsel %vm88, %v67, 0
    %92 = vmatpush.bf16.msra.mxu0 0
    %93 = vmatpush.bf16.msra.mxu0 0
    %94 = vmatpush.bf16.msra.mxu0 0
    %95 = vmatpush.bf16.msra.mxu0 0
    %96 = vmatpush.bf16.msra.mxu0 0
    %97 = vmatpush.bf16.msra.mxu0 0
    %98 = vmatpush.bf16.msra.mxu0 %v85
    %99 = vmatpush.bf16.msra.mxu0 %v84
    %100 = vmatmul.bf16.gmra.mxu0 %v90
    %v101 = vpop.f32.mrf.mxu0
    %v102 = vadd.f32 %v74, %v101
    %v103 = vpop.f32.mrf.mxu0
    %104 = vdwg.mxu0
    %v105 = vtanh.pop %v102
    %v106 = vpack.c.bf16 %v105, %v105
    %v107 = vld [vmem:[#allocation7] sm:$0xf]
    %v108 = vld [vmem:[#allocation7 + $0x4] sm:$0xf]
    %v109 = vld [vmem:[#allocation7 + $0x8] sm:$0xf]
    %v110 = vld [vmem:[#allocation7 + $0xc] sm:$0xf]
    %v111 = vld [vmem:[%s4] sm:$0x1]
    %v113 = vperm.slane %v111, 0
    %v119 = vunpack.c.l.b16 %v107
    %v120 = vunpack.c.l.b16 %v108
    %v121 = vunpack.c.l.b16 %v109
    %v122 = vunpack.c.l.b16 %v110
    %v123 = vpack.c.b16 %v120, %v119
    %v124 = vpack.c.b16 %v122, %v121
    %v128 = vsel %vm88, %v106, 0
    %130 = vmatpush.bf16.msra.mxu0 0
    %131 = vmatpush.bf16.msra.mxu0 0
    %132 = vmatpush.bf16.msra.mxu0 0
    %133 = vmatpush.bf16.msra.mxu0 0
    %134 = vmatpush.bf16.msra.mxu0 0
    %135 = vmatpush.bf16.msra.mxu0 0
    %136 = vmatpush.bf16.msra.mxu0 %v124
    %137 = vmatpush.bf16.msra.mxu0 %v123
    %138 = vmatmul.bf16.gmra.mxu0 %v128
    %v139 = vpop.f32.mrf.mxu0
    %v140 = vadd.f32 %v113, %v139
    %v141 = vpop.f32.mrf.mxu0
    %142 = vdwg.mxu0
    %143 = vst [vmem:[#allocation8] sm:$0x3] %v140
    // Predicated region
    $region34: #{tpu_custom_call.1} parent=1 // pred_check
      _
    $region35: #{tpu_custom_call.1} parent=1 // pred_check_branch
      %145 = sbr.rel (0) target = $region37
    $region36: #{tpu_custom_call.1} parent=1 // pred_region
      %147 = vsyncadd [#allocation4], 0
      %s149 = sshll.u32 [#allocation8], 4
      %s150 = int_to_ptr.vmem [resolvable:$true] %s149
      %s151 = sshll.u32 %s5, 4
      %s152 = int_to_ptr.hbm [resolvable:$true] %s151
      %154 = dma.vmem_to_hbm [thread:$0]  %s150, 32, %s152, [#allocation4]
    $region37: #{tpu_custom_call.1} parent=1 // pred_fallthru
      _
    // Predicated region
    $region38: #{tpu_custom_call.1} parent=1 // pred_check
      _
    $region39: #{tpu_custom_call.1} parent=1 // pred_check_branch
      %156 = sbr.rel (0) target = $region41
    $region40: #{tpu_custom_call.1} parent=1 // pred_region
      %158 = dma.done [#allocation4], 32
    $region41: #{tpu_custom_call.1} parent=1 // pred_fallthru
      _
    %159 = vsyncpa [#allocation3], 1
    %160 = vsyncpa [#allocation6], 1
    %161 = vsyncpa [#allocation4], 1

</llo_original>
